<compile_context>
chip_gen: v6e
topology: v6e:2x2x1
jax: 0.10.0
libtpu: 0.0.40
codegen_flags: <defaults>
</compile_context>

<pallas_src>
import functools

import jax
import jax.numpy as jnp
import numpy as np
from jax.experimental import pallas as pl
from jax.experimental.pallas import tpu as pltpu


# -----------------------------------------------------------------------------
# Pallas kernels
# -----------------------------------------------------------------------------
def _conv_mm_kernel(p_ref, w_ref, b_ref, o_ref, *, act, mxu_dtype):
    # p_ref: (1, TM, K) im2col patches; w_ref: (K, Cout); b_ref: (1, Cout)
    # o_ref: (1, TM, Cout).  Fused: matmul + bias + (optional) LeakyReLU(0.2).
    p = p_ref[0]
    w = w_ref[...]
    if mxu_dtype != jnp.float32:
        p = p.astype(mxu_dtype)
        w = w.astype(mxu_dtype)
    y = jnp.dot(p, w, preferred_element_type=jnp.float32) + b_ref[...]
    if act == "lrelu":
        y = jnp.where(y >= 0.0, y, 0.2 * y)
    o_ref[0] = y


def _pick_tile(M, K, Cout, budget_bytes=4 << 20):
    """Largest divisor of M (multiple of 8, or M itself) fitting a VMEM budget."""
    row_bytes = 4 * (K + Cout)
    limit = max(1, budget_bytes // row_bytes)
    best = M                       # single full-M tile is always correct
    if M > limit:
        cand = [t for t in range(8, min(M, limit) + 1, 8) if M % t == 0]
        if cand:
            best = max(cand)
    return best


def conv_mm(patches, wmat, bias, *, act=None, mxu_dtype=jnp.float32):
    """Fused (patches @ wmat + bias [+ LeakyReLU]) over grid (batch, M-tiles)."""
    patches = patches.astype(jnp.float32)
    B, M, K = patches.shape
    Cout = wmat.shape[1]
    TM = _pick_tile(M, K, Cout)
    kern = functools.partial(_conv_mm_kernel, act=act, mxu_dtype=mxu_dtype)
    return pl.pallas_call(
        kern,
        out_shape=jax.ShapeDtypeStruct((B, M, Cout), jnp.float32),
        grid=(B, M // TM),
        in_specs=[pl.BlockSpec((1, TM, K), lambda i, j: (i, j, 0)),
                  pl.BlockSpec((K, Cout), lambda i, j: (0, 0)),
                  pl.BlockSpec((1, Cout), lambda i, j: (0, 0))],
        out_specs=pl.BlockSpec((1, TM, Cout), lambda i, j: (i, j, 0)),
        compiler_params=pltpu.CompilerParams(
            dimension_semantics=("parallel", "parallel")),
    )(patches, wmat.astype(jnp.float32),
      bias.reshape(1, Cout).astype(jnp.float32))


def _avgpool_kernel(xp_ref, o_ref):
    # AvgPool2d(kernel=2, stride=1, padding=1, count_include_pad=False).
    # xp_ref: (1, H+2, W+2, C) zero-padded; o_ref: (1, H+1, W+1, C).
    Ho, Wo = o_ref.shape[1], o_ref.shape[2]
    s = (xp_ref[0, 0:Ho, 0:Wo, :] + xp_ref[0, 0:Ho, 1:Wo + 1, :]
         + xp_ref[0, 1:Ho + 1, 0:Wo, :] + xp_ref[0, 1:Ho + 1, 1:Wo + 1, :])
    ri = jax.lax.broadcasted_iota(jnp.int32, (Ho, Wo), 0)
    ci = jax.lax.broadcasted_iota(jnp.int32, (Ho, Wo), 1)
    rcnt = jnp.where((ri == 0) | (ri == Ho - 1), 1.0, 2.0)
    ccnt = jnp.where((ci == 0) | (ci == Wo - 1), 1.0, 2.0)
    o_ref[0] = s * (1.0 / (rcnt * ccnt))[:, :, None]


def avgpool2x2_s1_p1(x):
    """AvgPool2d(2, stride=1, padding=[1,1], count_include_pad=False) on NHWC."""
    B, H, W, C = x.shape
    Ho, Wo = H + 1, W + 1
    xp = jnp.pad(x.astype(jnp.float32), ((0, 0), (1, 1), (1, 1), (0, 0)))
    return pl.pallas_call(
        _avgpool_kernel,
        out_shape=jax.ShapeDtypeStruct((B, Ho, Wo, C), jnp.float32),
        grid=(B,),
        in_specs=[pl.BlockSpec((1, H + 2, W + 2, C), lambda i: (i, 0, 0, 0))],
        out_specs=pl.BlockSpec((1, Ho, Wo, C), lambda i: (i, 0, 0, 0)),
        compiler_params=pltpu.CompilerParams(dimension_semantics=("parallel",)),
    )(xp)


# -----------------------------------------------------------------------------
# Glue: im2col patch extraction (pure data plumbing, left to XLA)
# -----------------------------------------------------------------------------
def im2col_3x3_s2p1(x):
    """3x3 / stride-2 / zero-pad-1 patches.  x: (B,H,W,C) -> ((B,Ho*Wo,9C), Ho, Wo).
    K ordering = (dy*3 + dx)*C + c, matching w_hwio.reshape(9*C, Cout)."""
    B, H, W, C = x.shape
    Ho = (H - 1) // 2 + 1
    Wo = (W - 1) // 2 + 1
    xp = jnp.pad(x.astype(jnp.float32), ((0, 0), (1, 1), (1, 1), (0, 0)))
    cols = []
    for dy in range(3):
        for dx in range(3):
            cols.append(jax.lax.slice(
                xp, (0, dy, dx, 0),
                (B, dy + 2 * (Ho - 1) + 1, dx + 2 * (Wo - 1) + 1, C),
                (1, 2, 2, 1)))
    patches = jnp.concatenate(cols, axis=-1)          # (B, Ho, Wo, 9*C)
    return patches.reshape(B, Ho * Wo, 9 * C), Ho, Wo


# -----------------------------------------------------------------------------
# The module
# -----------------------------------------------------------------------------
class MsImageDis:
    """Pallas/JAX port of the PyTorch MsImageDis (LSGAN, norm='none', lrelu).

    params: list (num_scales) of lists of (w, b); the first n_layer entries are
    HWIO (3,3,Cin,Cout) stride-2 convs, the last is a (Cin,1) 1x1 conv.
    """

    def __init__(self, params, input_dim=3, mxu_dtype=jnp.float32):
        self.n_layer = 3
        self.gan_type = "lsgan"
        self.dim = 64
        self.norm = "none"
        self.activ = "lrelu"
        self.num_scales = 3
        self.pad_type = "zero"
        self.input_dim = input_dim
        self.mxu_dtype = mxu_dtype     # set jnp.bfloat16 on v6e/v7x for MXU feed
        # Pre-flatten 3x3 HWIO weights to (9*Cin, Cout) to match im2col ordering.
        self.cnns = []
        for layers in params:
            flat = []
            for (w, b) in layers:
                if w.ndim == 4:
                    k = w.shape[0] * w.shape[1] * w.shape[2]
                    flat.append((w.reshape(k, w.shape[3]).astype(jnp.float32),
                                 b.astype(jnp.float32)))
                else:
                    flat.append((w.astype(jnp.float32), b.astype(jnp.float32)))
            self.cnns.append(flat)

    # -- one scale's CNN: 3 fused conv+lrelu kernels + fused 1x1 conv kernel --
    def _run_cnn(self, x, layers):
        h = x
        for (wmat, b) in layers[:-1]:
            patches, Ho, Wo = im2col_3x3_s2p1(h)
            y = conv_mm(patches, wmat, b, act="lrelu", mxu_dtype=self.mxu_dtype)
            h = y.reshape(h.shape[0], Ho, Wo, wmat.shape[1])
        w1, b1 = layers[-1]                       # final 1x1 conv, no activation
        B, H, W, C = h.shape
        y = conv_mm(h.reshape(B, H * W, C), w1, b1, act=None,
                    mxu_dtype=self.mxu_dtype)
        return jnp.transpose(y.reshape(B, H, W, 1), (0, 3, 1, 2))   # NCHW out

    def forward(self, x):
        # x: NCHW; internal layout is NHWC (channels on the 128-lane axis).
        outputs = []
        h = jnp.transpose(x, (0, 2, 3, 1)).astype(jnp.float32)
        for s, layers in enumerate(self.cnns):
            outputs.append(self._run_cnn(h, layers))
            if s + 1 < self.num_scales:           # last downsample result unused
                h = avgpool2x2_s1_p1(h)
        return outputs

    def __call__(self, x):
        return self.forward(x)

    def calc_dis_loss(self, input_fake, input_real):
        # Fake and real share one batched forward (weights streamed once).
        B = input_fake.shape[0]
        outs = self.forward(jnp.concatenate([input_fake, input_real], axis=0))
        loss = jnp.float32(0.0)
        for out in outs:
            out0, out1 = out[:B], out[B:]
            # TODO(synk): LSGAN scalar means stay in jnp — score maps are tiny
            # (B,1,h,w), not worth a dedicated reduction kernel.
            loss = loss + jnp.mean((out0 - 0.0) ** 2) + jnp.mean((out1 - 1.0) ** 2)
        return loss

    def calc_gen_loss(self, input_fake):
        outs = self.forward(input_fake)
        loss = jnp.float32(0.0)
        for out in outs:
            loss = loss + jnp.mean((out - 1.0) ** 2)
        return loss


# -----------------------------------------------------------------------------
# Deterministic parameter init + pure-JAX reference for correctness checking
# -----------------------------------------------------------------------------
def init_ms_params(key, input_dim=3, dim=64, n_layer=3, num_scales=3):
    scales = []
    for _ in range(num_scales):
        layers = []
        chans = [(input_dim, dim)]
        d = dim
        for _ in range(n_layer - 1):
            chans.append((d, d * 2))
            d *= 2
        for (ci, co) in chans:
            key, kw, kb = jax.random.split(key, 3)
            w = jax.random.normal(kw, (3, 3, ci, co), jnp.float32) * np.sqrt(2.0 / (9 * ci))
            b = jax.random.normal(kb, (co,), jnp.float32) * 0.01
            layers.append((w, b))
        key, kw, kb = jax.random.split(key, 3)
        w = jax.random.normal(kw, (d, 1), jnp.float32) * np.sqrt(1.0 / d)
        b = jax.random.normal(kb, (1,), jnp.float32) * 0.01
        layers.append((w, b))
        scales.append(layers)
    return scales


def _ref_conv_block(x, w, b):
    dn = jax.lax.conv_dimension_numbers(x.shape, w.shape, ("NHWC", "HWIO", "NHWC"))
    y = jax.lax.conv_general_dilated(x, w, (2, 2), ((1, 1), (1, 1)),
                                     dimension_numbers=dn) + b
    return jnp.where(y >= 0.0, y, 0.2 * y)


def _ref_avgpool(x):
    pad = ((0, 0), (1, 1), (1, 1), (0, 0))
    s = jax.lax.reduce_window(x, 0.0, jax.lax.add, (1, 2, 2, 1), (1, 1, 1, 1), pad)
    c = jax.lax.reduce_window(jnp.ones_like(x), 0.0, jax.lax.add,
                              (1, 2, 2, 1), (1, 1, 1, 1), pad)
    return s / c


def reference_forward(params, x, num_scales=3):
    outs = []
    h = jnp.transpose(x, (0, 2, 3, 1)).astype(jnp.float32)
    for s in range(num_scales):
        y = h
        for (w, b) in params[s][:-1]:
            y = _ref_conv_block(y, w, b)
        w1, b1 = params[s][-1]
        y = jnp.einsum("bhwc,co->bhwo", y, w1) + b1
        outs.append(jnp.transpose(y, (0, 3, 1, 2)))
        if s + 1 < num_scales:
            h = _ref_avgpool(h)
    return outs


def reference_dis_loss(params, fake, real):
    outs0 = reference_forward(params, fake)
    outs1 = reference_forward(params, real)
    loss = jnp.float32(0.0)
    for o0, o1 in zip(outs0, outs1):
        loss = loss + jnp.mean((o0 - 0.0) ** 2) + jnp.mean((o1 - 1.0) ** 2)
    return loss


def reference_gen_loss(params, fake):
    loss = jnp.float32(0.0)
    for o in reference_forward(params, fake):
        loss = loss + jnp.mean((o - 1.0) ** 2)
    return loss


if __name__ == "__main__":
    key = jax.random.PRNGKey(0)
    k_fake, k_real, k_par = jax.random.split(key, 3)
    input_fake = jax.random.uniform(k_fake, (2, 3, 16, 16), jnp.float32, minval=-1.0, maxval=1.0)
    input_real = jax.random.uniform(k_real, (2, 3, 16, 16), jnp.float32, minval=-1.0, maxval=1.0)

    params = init_ms_params(k_par, input_dim=3)
    model = MsImageDis(params, input_dim=3)           # mxu_dtype=jnp.bfloat16 on v6e/v7x

    outs = model.forward(input_fake)
    dis_loss = model.calc_dis_loss(input_fake, input_real)
    gen_loss = model.calc_gen_loss(input_fake)
    (outs, dis_loss, gen_loss) = jax.block_until_ready((outs, dis_loss, gen_loss))

    outs_ref = reference_forward(params, input_fake)
    dis_ref = reference_dis_loss(params, input_fake, input_real)
    gen_ref = reference_gen_loss(params, input_fake)
    (outs_ref, dis_ref, gen_ref) = jax.block_until_ready((outs_ref, dis_ref, gen_ref))

    for o, r in zip(outs, outs_ref):
        np.testing.assert_allclose(np.asarray(o), np.asarray(r), rtol=2e-3, atol=2e-4)
    np.testing.assert_allclose(np.asarray(dis_loss), np.asarray(dis_ref), rtol=2e-3, atol=1e-5)
    np.testing.assert_allclose(np.asarray(gen_loss), np.asarray(gen_ref), rtol=2e-3, atol=1e-5)
    print("KERNEL_OK")
</pallas_src>

<mosaic_0001>
module attributes {stable_mosaic.version = 11 : i64} {
  func.func @_conv_mm_kernel(%arg0: i32, %arg1: i32, %arg2: memref<1x64x27xf32, #tpu.memory_space<vmem>>, %arg3: memref<27x64xf32, #tpu.memory_space<vmem>>, %arg4: memref<1x64xf32, #tpu.memory_space<vmem>>, %arg5: memref<1x64x64xf32, #tpu.memory_space<vmem>>) attributes {dimension_semantics = [#tpu.dimension_semantics<parallel>, #tpu.dimension_semantics<parallel>], iteration_bounds = array<i64: 2, 1>, scalar_prefetch = 0 : i64, scratch_operands = 0 : i64, tpu.core_type = #tpu.core_type<tc>, window_params = [{transform_indices = @transform_0, window_bounds = array<i64: 1, 64, 27>}, {pipeline_mode = #tpu.pipeline_mode<synchronous>, transform_indices = @transform_1, window_bounds = array<i64: 27, 64>}, {pipeline_mode = #tpu.pipeline_mode<synchronous>, transform_indices = @transform_2, window_bounds = array<i64: 1, 64>}, {transform_indices = @transform_3, window_bounds = array<i64: 1, 64, 64>}]} {
    %c0 = arith.constant 0 : index
    %c0_0 = arith.constant 0 : index
    %c0_1 = arith.constant 0 : index
    %0 = vector.load %arg2[%c0, %c0_0, %c0_1] : memref<1x64x27xf32, #tpu.memory_space<vmem>>, vector<1x64x27xf32>
    %1 = vector.shape_cast %0 : vector<1x64x27xf32> to vector<64x27xf32>
    %c0_2 = arith.constant 0 : index
    %c0_3 = arith.constant 0 : index
    %2 = vector.load %arg3[%c0_2, %c0_3] : memref<27x64xf32, #tpu.memory_space<vmem>>, vector<27x64xf32>
    %cst = arith.constant dense<0.000000e+00> : vector<64x64xf32>
    %3 = tpu.matmul %1, %2, %cst {dimension_numbers = #tpu.dot_dimension_numbers<[1], [0], [0], [1], [0, 0, 1, 1], [], []>} : vector<64x27xf32>, vector<27x64xf32>, vector<64x64xf32> -> vector<64x64xf32>
    %c0_4 = arith.constant 0 : index
    %c0_5 = arith.constant 0 : index
    %4 = vector.load %arg4[%c0_4, %c0_5] : memref<1x64xf32, #tpu.memory_space<vmem>>, vector<1x64xf32>
    %5 = vector.broadcast %4 : vector<1x64xf32> to vector<64x64xf32>
    %6 = arith.addf %3, %5 : vector<64x64xf32>
    %cst_6 = arith.constant 0.000000e+00 : f32
    %7 = vector.broadcast %cst_6 : f32 to vector<64x64xf32>
    %8 = arith.cmpf oge, %6, %7 : vector<64x64xf32>
    %cst_7 = arith.constant 2.000000e-01 : f32
    %9 = vector.broadcast %cst_7 : f32 to vector<64x64xf32>
    %10 = arith.mulf %9, %6 : vector<64x64xf32>
    %11 = arith.select %8, %6, %10 : vector<64x64xi1>, vector<64x64xf32>
    %c0_8 = arith.constant 0 : index
    %c0_9 = arith.constant 0 : index
    %c0_10 = arith.constant 0 : index
    %12 = vector.load %arg5[%c0_8, %c0_9, %c0_10] : memref<1x64x64xf32, #tpu.memory_space<vmem>>, vector<1x64x64xf32>
    %13 = vector.shape_cast %12 : vector<1x64x64xf32> to vector<64x64xf32>
    %14 = vector.shape_cast %11 : vector<64x64xf32> to vector<1x64x64xf32>
    tpu.vector_store %arg5[%c0_8, %c0_9, %c0_10], %14 {strides = array<i32>} : memref<1x64x64xf32, #tpu.memory_space<vmem>>, vector<1x64x64xf32>,
    return
  }
  func.func @transform_0(%arg0: i32, %arg1: i32) -> (i32, i32, i32) {
    %c0_i32 = arith.constant 0 : i32
    %c0_i32_0 = arith.constant 0 : i32
    return %arg0, %arg1, %c0_i32 : i32, i32, i32
  }
  func.func @transform_1(%arg0: i32, %arg1: i32) -> (i32, i32) {
    %c0_i32 = arith.constant 0 : i32
    %c0_i32_0 = arith.constant 0 : i32
    %c0_i32_1 = arith.constant 0 : i32
    return %c0_i32, %c0_i32_0 : i32, i32
  }
  func.func @transform_2(%arg0: i32, %arg1: i32) -> (i32, i32) {
    %c0_i32 = arith.constant 0 : i32
    %c0_i32_0 = arith.constant 0 : i32
    %c0_i32_1 = arith.constant 0 : i32
    return %c0_i32, %c0_i32_0 : i32, i32
  }
  func.func @transform_3(%arg0: i32, %arg1: i32) -> (i32, i32, i32) {
    %c0_i32 = arith.constant 0 : i32
    %c0_i32_0 = arith.constant 0 : i32
    return %arg0, %arg1, %c0_i32 : i32, i32, i32
  }
}

</mosaic_0001>

<llo_original>
// kernel: tpu_custom_call.1
$region0: #{tpu_custom_call.1}
  #allocation0 [shape = 'u32[]', space=smem, size = 0x4, offset = 0x4, fixed_abs, tag = 'smem constant byte address 0x4 - core index']
  #allocation1 [shape = 'u32[144,128]{1,0:T(1,128)}', space=vmem, size = 0x12000, scoped, tag = 'internal scratch']
  %s0 = inlined_call_operand.vmem [shape: f32[2,64,27], index: 0, kind: input, shape index: {}]
  %s1 = inlined_call_operand.vmem [shape: f32[27,64], index: 1, kind: input, shape index: {}]
  %s2 = inlined_call_operand.vmem [shape: f32[1,64], index: 2, kind: input, shape index: {}]
  %s3 = inlined_call_operand.hbm [shape: f32[2,64,64], index: 3, kind: output, shape index: {}]
  %s4 = sld [smem:[#allocation0]]
  $region45: #{tpu_custom_call.1} parent=0
    _
  %s6 = ssub.s32 1, %s4
  %s7 = scalar_select 0, %s6, %s4
  $region1: #{tpu_custom_call.1} parent=0
    #allocation2 [shape = 'u8[65536]{0}', space=vmem, size = 0x10000, scoped, tag = 'output window, operand 0']
    #allocation3 [shape = 's32[2]{0}', space=sflag, size = 0x8, scoped, tag = 'scoped memory for tpu_custom_call.1']
    %8 = vsyncpa [#allocation3], 0
    %s9 = scalar_lea.sflag [#allocation3], 1
    %10 = vsyncpa %s9, 0
    loop: start=0, step=1, limit=4
    $region2: #{tpu_custom_call.1} parent=1 // loop_pre_header
      _
    $region3: #{tpu_custom_call.1} parent=1 // loop_header
      %s12 = sphi 0, %s16
      %p13 = scmp.ge.s32.totalorder %s12, 4
      %s19 = sphi 0, %s31
      %s20 = sphi 0, %s27
      %s21 = sphi 0, %s19
      %s22 = sphi 0, %s20
      %s23 = sphi 0, %s21
      %s24 = sphi 0, %s22
      %s36 = sphi 0, %s38
      %s39 = sphi 0, %s36
      %s40 = sphi 0, %s39
      %s56 = sphi 0, %s40
      %s60 = sphi 0, %s60
      %s62 = sphi 0, %s60
      %s63 = sphi 0, %s62
      %s77 = sphi 0, %s63
      %s81 = sphi 0, %s81
      %s83 = sphi 0, %s81
      %s84 = sphi 0, %s83
      %s98 = sphi 0, %s84
      %s106 = sphi 0, %s108
      %s109 = sphi 0, %s106
      %s110 = sphi 0, %s109
      %s126 = sphi 0, %s110
    $region4: #{tpu_custom_call.1} parent=1 // loop_header_branch
      %15 = sbr.rel (%p13) target = $region8
    $region5: #{tpu_custom_call.1} parent=1 // loop_body
      %s17 = ssub.s32 %s12, 1
      %s18 = ssub.s32 %s12, 2
      %s25 = sadd.s32 1, %s20
      %p26 = scmp.ge.s32.totalorder %s25, 1
      %s27 = scalar_select %p26, 0, %s25
      %s28 = sadd.s32 1, %s19
      %s29 = scalar_select %p26, %s28, %s19
      %p30 = scmp.ge.s32.totalorder %s29, 2
      %s31 = scalar_select %p30, 0, %s29
      %s32 = ssub.s32 %s19, %s31
      %s33 = ssub.s32 %s20, %s27
      %s34 = sor.u32 %s32, %s33
      %p35 = scmp.eq.s32.totalorder %s34, 0
      %s37 = sadd.s32 %s36, 1
      %s38 = scalar_select %p35, %s36, %s37
      %p41 = pneg %p35
      %p42 = scmp.eq.s32.totalorder %s12, 1
      %p43 = por %p41, %p42
      %p44 = scmp.ne.s32.totalorder %s36, %s39
      %p45 = scmp.eq.s32.totalorder %s12, 0
      %p46 = por %p44, %p45
      %p47 = scmp.ne.s32.totalorder %s36, %s39
      %p48 = scmp.eq.s32.totalorder %s17, 1
      %p49 = por %p47, %p48
      %p50 = scmp.ne.s32.totalorder %s39, %s40
      %p51 = scmp.eq.s32.totalorder %s17, 0
      %p52 = por %p50, %p51
      %p53 = scmp.ne.s32.totalorder %s39, %s40
      %p54 = scmp.eq.s32.totalorder %s18, 1
      %p55 = por %p53, %p54
      %p57 = scmp.ne.s32.totalorder %s40, %s56
      %p58 = scmp.eq.s32.totalorder %s18, 0
      %p59 = por %p57, %p58
      %s61 = sadd.s32 %s60, 1
      %p64 = scmp.eq.s32.totalorder %s12, 1
      %p65 = scmp.ne.s32.totalorder %s60, %s62
      %p66 = scmp.eq.s32.totalorder %s12, 0
      %p67 = por %p65, %p66
      %p68 = scmp.ne.s32.totalorder %s60, %s62
      %p69 = scmp.eq.s32.totalorder %s17, 1
      %p70 = por %p68, %p69
      %p71 = scmp.ne.s32.totalorder %s62, %s63
      %p72 = scmp.eq.s32.totalorder %s17, 0
      %p73 = por %p71, %p72
      %p74 = scmp.ne.s32.totalorder %s62, %s63
      %p75 = scmp.eq.s32.totalorder %s18, 1
      %p76 = por %p74, %p75
      %p78 = scmp.ne.s32.totalorder %s63, %s77
      %p79 = scmp.eq.s32.totalorder %s18, 0
      %p80 = por %p78, %p79
      %s82 = sadd.s32 %s81, 1
      %p85 = scmp.eq.s32.totalorder %s12, 1
      %p86 = scmp.ne.s32.totalorder %s81, %s83
      %p87 = scmp.eq.s32.totalorder %s12, 0
      %p88 = por %p86, %p87
      %p89 = scmp.ne.s32.totalorder %s81, %s83
      %p90 = scmp.eq.s32.totalorder %s17, 1
      %p91 = por %p89, %p90
      %p92 = scmp.ne.s32.totalorder %s83, %s84
      %p93 = scmp.eq.s32.totalorder %s17, 0
      %p94 = por %p92, %p93
      %p95 = scmp.ne.s32.totalorder %s83, %s84
      %p96 = scmp.eq.s32.totalorder %s18, 1
      %p97 = por %p95, %p96
      %p99 = scmp.ne.s32.totalorder %s84, %s98
      %p100 = scmp.eq.s32.totalorder %s18, 0
      %p101 = por %p99, %p100
      %s102 = ssub.s32 %s19, %s31
      %s103 = ssub.s32 %s20, %s27
      %s104 = sor.u32 %s102, %s103
      %p105 = scmp.eq.s32.totalorder %s104, 0
      %s107 = sadd.s32 %s106, 1
      %s108 = scalar_select %p105, %s106, %s107
      %p111 = pneg %p105
      %p112 = scmp.eq.s32.totalorder %s12, 1
      %p113 = por %p111, %p112
      %p114 = scmp.ne.s32.totalorder %s106, %s109
      %p115 = scmp.eq.s32.totalorder %s12, 0
      %p116 = por %p114, %p115
      %p117 = scmp.ne.s32.totalorder %s106, %s109
      %p118 = scmp.eq.s32.totalorder %s17, 1
      %p119 = por %p117, %p118
      %p120 = scmp.ne.s32.totalorder %s109, %s110
      %p121 = scmp.eq.s32.totalorder %s17, 0
      %p122 = por %p120, %p121
      %p123 = scmp.ne.s32.totalorder %s109, %s110
      %p124 = scmp.eq.s32.totalorder %s18, 1
      %p125 = por %p123, %p124
      %p127 = scmp.ne.s32.totalorder %s110, %s126
      %p128 = scmp.eq.s32.totalorder %s18, 0
      %p129 = por %p127, %p128
      %p130 = scmp.le.s32.totalorder 1, %s12
      %p131 = scmp.lt.s32.totalorder %s12, 3
      %p132 = pnand %p130, %p131
      %p133 = pneg %p132
      // Predicated region
      $region9: #{tpu_custom_call.1} parent=5 // pred_check
        _
      $region10: #{tpu_custom_call.1} parent=5 // pred_check_branch
        %135 = sbr.rel (%p132) target = $region12
      $region11: #{tpu_custom_call.1} parent=5 // pred_region
        %s136 = ssub.s32 %s12, 1
        // Predicated region
        $region13: #{tpu_custom_call.1} parent=11 // pred_check
          %p137 = pneg %p73
        $region14: #{tpu_custom_call.1} parent=11 // pred_check_branch
          %139 = sbr.rel (%p137) target = $region16
        $region15: #{tpu_custom_call.1} parent=11 // pred_region
          _
        $region16: #{tpu_custom_call.1} parent=11 // pred_fallthru
          _
        // Predicated region
        $region17: #{tpu_custom_call.1} parent=11 // pred_check
          %p140 = pneg %p94
        $region18: #{tpu_custom_call.1} parent=11 // pred_check_branch
          %142 = sbr.rel (%p140) target = $region20
        $region19: #{tpu_custom_call.1} parent=11 // pred_region
          _
        $region20: #{tpu_custom_call.1} parent=11 // pred_fallthru
          _
      $region12: #{tpu_custom_call.1} parent=5 // pred_fallthru
        _
      %p143 = scmp.lt.s32.totalorder %s12, 2
      // Predicated region
      $region21: #{tpu_custom_call.1} parent=5 // pred_check
        %p144 = pneg %p143
      $region22: #{tpu_custom_call.1} parent=5 // pred_check_branch
        %146 = sbr.rel (%p144) target = $region24
      $region23: #{tpu_custom_call.1} parent=5 // pred_region
        // Predicated region
        $region25: #{tpu_custom_call.1} parent=23 // pred_check
          %p147 = pneg %p46
        $region26: #{tpu_custom_call.1} parent=23 // pred_check_branch
          %149 = sbr.rel (%p147) target = $region28
        $region27: #{tpu_custom_call.1} parent=23 // pred_region
          %s150 = smul.u32 8, %s20
          %p151 = scmp.lt.s32.totalorder %s19, 1
          %s152 = scalar_select %p151, %s19, 1
          %p153 = scmp.lt.s32.totalorder %s150, 7
          %s154 = scalar_select %p153, %s150, 7
          %s155 = smul.addr %s152, 8
          %s156 = sadd.s32 %s154, %s155
          %s157 = smul.addr %s156, 8
          %s158 = scalar_lea.vmem %s0, %s157
          %s159 = smul.u32 8, %s20
        $region28: #{tpu_custom_call.1} parent=23 // pred_fallthru
          _
      $region24: #{tpu_custom_call.1} parent=5 // pred_fallthru
        _
      %p160 = scmp.le.s32.totalorder 1, %s12
      %p161 = scmp.lt.s32.totalorder %s12, 3
      %p162 = pnand %p160, %p161
      %p163 = pneg %p162
      // Predicated region
      $region29: #{tpu_custom_call.1} parent=5 // pred_check
        _
      $region30: #{tpu_custom_call.1} parent=5 // pred_check_branch
        %165 = sbr.rel (%p162) target = $region32
      $region31: #{tpu_custom_call.1} parent=5 // pred_region
        %s166 = ssub.s32 %s12, 1
        %s167 = smul.u32 8, %s22
        %p168 = scmp.lt.s32.totalorder %s21, 1
        %s169 = scalar_select %p168, %s21, 1
        %p170 = scmp.lt.s32.totalorder %s167, 7
        %s171 = scalar_select %p170, %s167, 7
        %s172 = smul.addr %s169, 8
        %s173 = sadd.s32 %s171, %s172
        %s174 = smul.addr %s173, 8
        %s175 = scalar_lea.vmem %s0, %s174
        %p176 = pneg %p52
        %p177 = pneg %p49
        %p178 = pneg %p73
        %p179 = pneg %p70
        %p180 = pneg %p94
        %p181 = pneg %p91
        %p182 = pneg %p122
        %p183 = pneg %p119
        %s184 = sand.u32 %s109, 1
        %s185 = scalar_lea.sflag [#allocation3], %s184
        %s186 = sand.u32 %s109, 1
        %s187 = smul.addr %s186, 64
        %s188 = scalar_lea.vmem [#allocation2], %s187
        %s189 = smul.u32 8, %s22
        %p190 = scmp.lt.s32.totalorder %s21, 1
        %s191 = scalar_select %p190, %s21, 1
        %p192 = scmp.lt.s32.totalorder %s189, 7
        %s193 = scalar_select %p192, %s189, 7
        %s194 = smul.addr %s191, 8
        %s195 = sadd.s32 %s193, %s194
        %s196 = smul.addr %s195, 8
        %s197 = scalar_lea.vmem %s0, %s196
        %s198 = smul.u32 8, %s22
        %s199 = smul.u32 8, %s22
        %v200 = vld [vmem:[%s197] sm:$0xff]
        %v201 = vld [vmem:[%s197 + $0x8] sm:$0xff]
        %v202 = vld [vmem:[%s197 + $0x10] sm:$0xff]
        %v203 = vld [vmem:[%s197 + $0x18] sm:$0xff]
        %v204 = vld [vmem:[%s197 + $0x20] sm:$0xff]
        %v205 = vld [vmem:[%s197 + $0x28] sm:$0xff]
        %v206 = vld [vmem:[%s197 + $0x30] sm:$0xff]
        %v207 = vld [vmem:[%s197 + $0x38] sm:$0xff]
        %v208 = vld [vmem:[%s1] sm:$0xff]
        %v209 = vld [vmem:[%s1 + $0x8] sm:$0xff]
        %v210 = vld [vmem:[%s1 + $0x10] sm:$0xff]
        %v211 = vld [vmem:[%s1 + $0x18] sm:$0x7]
        %v212 = vld [vmem:[%s2] sm:$0x1]
        %v214 = vlaneseq
        %v215 = vshrl.u32 %v214, 7
        %v216 = vsub.s32 0, %v215
        %v217 = vrot.slane %v212, %v216
        %vm219 = vcmask 220160
        %v221 = vsel %vm219, %v200, 0
        %v224 = vsel %vm219, %v201, 0
        %v227 = vsel %vm219, %v202, 0
        %v230 = vsel %vm219, %v203, 0
        %v233 = vsel %vm219, %v204, 0
        %v236 = vsel %vm219, %v205, 0
        %v239 = vsel %vm219, %v206, 0
        %v242 = vsel %vm219, %v207, 0
        %vm244 = vcmask 1042432
        %v246 = vsel %vm244, %v211, 0
        %248 = vmatprep.subr.mxu0 0.0
        %249 = vmatpush1.msra.mxu0 0.0
        %250 = vmatprep.subr.mxu0 0.0
        %251 = vmatpush1.msra.mxu0 0.0
        %252 = vmatprep.subr.mxu0 0.0
        %253 = vmatpush1.msra.mxu0 0.0
        %254 = vmatprep.subr.mxu0 0.0
        %255 = vmatpush1.msra.mxu0 0.0
        %256 = vmatprep.subr.mxu0 0.0
        %257 = vmatpush1.msra.mxu0 0.0
        %258 = vmatprep.subr.mxu0 0.0
        %259 = vmatpush1.msra.mxu0 0.0
        %260 = vmatprep.subr.mxu0 0.0
        %261 = vmatpush1.msra.mxu0 0.0
        %262 = vmatprep.subr.mxu0 0.0
        %263 = vmatpush1.msra.mxu0 0.0
        %264 = vmatprep.subr.mxu0 0.0
        %265 = vmatpush1.msra.mxu0 0.0
        %266 = vmatprep.subr.mxu0 0.0
        %267 = vmatpush1.msra.mxu0 0.0
        %268 = vmatprep.subr.mxu0 0.0
        %269 = vmatpush1.msra.mxu0 0.0
        %270 = vmatprep.subr.mxu0 0.0
        %271 = vmatpush1.msra.mxu0 0.0
        %272 = vmatprep.subr.mxu0 0.0
        %273 = vmatpush1.msra.mxu0 %v246
        %274 = vmatprep.subr.mxu0 0.0
        %275 = vmatpush1.msra.mxu0 %v210
        %276 = vmatprep.subr.mxu0 0.0
        %277 = vmatpush1.msra.mxu0 %v209
        %278 = vmatprep.subr.mxu0 0.0
        %279 = vmatpush1.msra.mxu0 %v208
        %280 = vmatprep.subr.mxu0 0.0
        %281 = vmatpush2.msra.mxu0 0.0
        %282 = vmatprep.subr.mxu0 0.0
        %283 = vmatpush2.msra.mxu0 0.0
        %284 = vmatprep.subr.mxu0 0.0
        %285 = vmatpush2.msra.mxu0 0.0
        %286 = vmatprep.subr.mxu0 0.0
        %287 = vmatpush2.msra.mxu0 0.0
        %288 = vmatprep.subr.mxu0 0.0
        %289 = vmatpush2.msra.mxu0 0.0
        %290 = vmatprep.subr.mxu0 0.0
        %291 = vmatpush2.msra.mxu0 0.0
        %292 = vmatprep.subr.mxu0 0.0
        %293 = vmatpush2.msra.mxu0 0.0
        %294 = vmatprep.subr.mxu0 0.0
        %295 = vmatpush2.msra.mxu0 0.0
        %296 = vmatprep.subr.mxu0 0.0
        %297 = vmatpush2.msra.mxu0 0.0
        %298 = vmatprep.subr.mxu0 0.0
        %299 = vmatpush2.msra.mxu0 0.0
        %300 = vmatprep.subr.mxu0 0.0
        %301 = vmatpush2.msra.mxu0 0.0
        %302 = vmatprep.subr.mxu0 0.0
        %303 = vmatpush2.msra.mxu0 0.0
        %304 = vmatprep.subr.mxu0 0.0
        %305 = vmatpush2.msra.mxu0 0.0
        %306 = vmatprep.subr.mxu0 0.0
        %307 = vmatpush2.msra.mxu0 0.0
        %308 = vmatprep.subr.mxu0 0.0
        %309 = vmatpush2.msra.mxu0 0.0
        %310 = vmatprep.subr.mxu0 0.0
        %311 = vmatpush2.msra.mxu0 0.0
        %312 = vmatprep.mubr.f32.mxu0 0.0
        %313 = vmatmul.mubr.f32.gmra.mxu0 %v221
        %v314 = vpop.f32.mrf.mxu0
        %v315 = vadd.f32 %v217, %v314
        %v316 = vpop.f32.mrf.mxu0
        %317 = vmatprep.mubr.f32.mxu0 0.0
        %318 = vmatmul.mubr.f32.gmra.mxu0 %v224
        %v319 = vpop.f32.mrf.mxu0
        %v320 = vadd.f32 %v217, %v319
        %v321 = vpop.f32.mrf.mxu0
        %322 = vmatprep.mubr.f32.mxu0 0.0
        %323 = vmatmul.mubr.f32.gmra.mxu0 %v227
        %v324 = vpop.f32.mrf.mxu0
        %v325 = vadd.f32 %v217, %v324
        %v326 = vpop.f32.mrf.mxu0
        %327 = vmatprep.mubr.f32.mxu0 0.0
        %328 = vmatmul.mubr.f32.gmra.mxu0 %v230
        %v329 = vpop.f32.mrf.mxu0
        %v330 = vadd.f32 %v217, %v329
        %v331 = vpop.f32.mrf.mxu0
        %332 = vmatprep.mubr.f32.mxu0 0.0
        %333 = vmatmul.mubr.f32.gmra.mxu0 %v233
        %v334 = vpop.f32.mrf.mxu0
        %v335 = vadd.f32 %v217, %v334
        %v336 = vpop.f32.mrf.mxu0
        %337 = vmatprep.mubr.f32.mxu0 0.0
        %338 = vmatmul.mubr.f32.gmra.mxu0 %v236
        %v339 = vpop.f32.mrf.mxu0
        %v340 = vadd.f32 %v217, %v339
        %v341 = vpop.f32.mrf.mxu0
        %342 = vmatprep.mubr.f32.mxu0 0.0
        %343 = vmatmul.mubr.f32.gmra.mxu0 %v239
        %v344 = vpop.f32.mrf.mxu0
        %v345 = vadd.f32 %v217, %v344
        %v346 = vpop.f32.mrf.mxu0
        %347 = vmatprep.mubr.f32.mxu0 0.0
        %348 = vmatmul.mubr.f32.gmra.mxu0 %v242
        %v349 = vpop.f32.mrf.mxu0
        %v350 = vadd.f32 %v217, %v349
        %v351 = vpop.f32.mrf.mxu0
        %352 = vdwg.mxu0
        %vm353 = vcmp.ge.f32.partialorder %v315, 0.0
        %vm354 = vcmp.ge.f32.partialorder %v320, 0.0
        %vm355 = vcmp.ge.f32.partialorder %v325, 0.0
        %vm356 = vcmp.ge.f32.partialorder %v330, 0.0
        %vm357 = vcmp.ge.f32.partialorder %v335, 0.0
        %vm358 = vcmp.ge.f32.partialorder %v340, 0.0
        %vm359 = vcmp.ge.f32.partialorder %v345, 0.0
        %vm360 = vcmp.ge.f32.partialorder %v350, 0.0
        %v361 = vmul.f32 %v315, 0.2
        %v362 = vmul.f32 %v320, 0.2
        %v363 = vmul.f32 %v325, 0.2
        %v364 = vmul.f32 %v330, 0.2
        %v365 = vmul.f32 %v335, 0.2
        %v366 = vmul.f32 %v340, 0.2
        %v367 = vmul.f32 %v345, 0.2
        %v368 = vmul.f32 %v350, 0.2
        %v369 = vsel %vm353, %v315, %v361
        %v370 = vsel %vm354, %v320, %v362
        %v371 = vsel %vm355, %v325, %v363
        %v372 = vsel %vm356, %v330, %v364
        %v373 = vsel %vm357, %v335, %v365
        %v374 = vsel %vm358, %v340, %v366
        %v375 = vsel %vm359, %v345, %v367
        %v376 = vsel %vm360, %v350, %v368
        %vm377 = vcmask 523264
        %378 = vst.msk [vmem:[%s188] sm:$0xff] %vm377, %v369
        %379 = vst.msk [vmem:[%s188 + $0x8] sm:$0xff] %vm377, %v370
        %380 = vst.msk [vmem:[%s188 + $0x10] sm:$0xff] %vm377, %v371
        %381 = vst.msk [vmem:[%s188 + $0x18] sm:$0xff] %vm377, %v372
        %382 = vst.msk [vmem:[%s188 + $0x20] sm:$0xff] %vm377, %v373
        %383 = vst.msk [vmem:[%s188 + $0x28] sm:$0xff] %vm377, %v374
        %384 = vst.msk [vmem:[%s188 + $0x30] sm:$0xff] %vm377, %v375
        %385 = vst.msk [vmem:[%s188 + $0x38] sm:$0xff] %vm377, %v376
        %s386 = sand.u32 %s109, 1
        %s387 = scalar_lea.sflag [#allocation3], %s386
        %s388 = sand.u32 %s109, 1
        %s389 = smul.addr %s388, 64
        %s390 = scalar_lea.vmem [#allocation2], %s389
        // Predicated region
        $region33: #{tpu_custom_call.1} parent=31 // pred_check
          %p391 = pneg %p119
        $region34: #{tpu_custom_call.1} parent=31 // pred_check_branch
          %393 = sbr.rel (%p391) target = $region36
        $region35: #{tpu_custom_call.1} parent=31 // pred_region
          %s394 = smul.u32 8, %s22
          %s396 = ssub.s32 1024, 1024
          %397 = vsyncadd %s387, %s396
          %s398 = smul.addr %s21, 8
          %s399 = sadd.s32 %s394, %s398
          %s400 = smul.addr %s399, 128
          %s401 = scalar_lea.hbm %s3, %s400
          %s402 = sshll.u32 %s390, 4
          %s403 = int_to_ptr.vmem [resolvable:$true] %s402
          %408 = dma.vmem_to_hbm [thread:$0]  %s403, 1024, %s401, %s387, 128, 128, 8
        $region36: #{tpu_custom_call.1} parent=31 // pred_fallthru
          _
      $region32: #{tpu_custom_call.1} parent=5 // pred_fallthru
        _
      %p409 = scmp.le.s32.totalorder 2, %s12
      // Predicated region
      $region37: #{tpu_custom_call.1} parent=5 // pred_check
        %p410 = pneg %p409
      $region38: #{tpu_custom_call.1} parent=5 // pred_check_branch
        %412 = sbr.rel (%p410) target = $region40
      $region39: #{tpu_custom_call.1} parent=5 // pred_region
        %s413 = ssub.s32 %s12, 2
        // Predicated region
        $region41: #{tpu_custom_call.1} parent=39 // pred_check
          %p414 = pneg %p125
        $region42: #{tpu_custom_call.1} parent=39 // pred_check_branch
          %416 = sbr.rel (%p414) target = $region44
        $region43: #{tpu_custom_call.1} parent=39 // pred_region
          %s417 = sand.u32 %s110, 1
          %s418 = scalar_lea.sflag [#allocation3], %s417
          %s419 = sand.u32 %s110, 1
          %s420 = smul.addr %s419, 64
          %s421 = scalar_lea.vmem [#allocation2], %s420
          %422 = dma.done %s418, 1024
        $region44: #{tpu_custom_call.1} parent=39 // pred_fallthru
          _
      $region40: #{tpu_custom_call.1} parent=5 // pred_fallthru
        _
    $region6: #{tpu_custom_call.1} parent=1 // loop_footer
      %s16 = sadd.s32 1, %s12
    $region7: #{tpu_custom_call.1} parent=1 // loop_footer_branch
      %11 = sbr.rel target = $region3
    $region8: #{tpu_custom_call.1} parent=1 // loop_exit
      _
    %423 = vsyncpa [#allocation3], 1
    %s424 = scalar_lea.sflag [#allocation3], 1
    %425 = vsyncpa %s424, 1

</llo_original>
